<compile_context>
chip_gen: v7x
topology: tpu7x:2x2x1
jax: 0.10.0
libtpu: 0.0.40
codegen_flags: <defaults>
</compile_context>

<pallas_src>
import math

import jax
import jax.numpy as jnp
from jax.experimental import pallas as pl
from jax.experimental.pallas import tpu as pltpu

NUM_HEADS = 4

# Abramowitz & Stegun 7.1.26 erf coefficients (max abs error ~1.5e-7).
_ERF_P = 0.3275911
_ERF_A1 = 0.254829592
_ERF_A2 = -0.284496736
_ERF_A3 = 1.421413741
_ERF_A4 = -1.453152027
_ERF_A5 = 1.061405429


def _gelu_exact(x):
    """Exact (erf-based) GELU matching torch.nn.GELU() to ~1e-7, using only exp/VPU ops."""
    z = x * (1.0 / math.sqrt(2.0))
    a = jnp.abs(z)
    t = 1.0 / (1.0 + _ERF_P * a)
    poly = t * (_ERF_A1 + t * (_ERF_A2 + t * (_ERF_A3 + t * (_ERF_A4 + t * _ERF_A5))))
    erf_abs = 1.0 - poly * jnp.exp(-a * a)
    erf_z = jnp.where(z >= 0.0, erf_abs, -erf_abs)
    return x * 0.5 * (1.0 + erf_z)


def _fusion_kernel(text_ref, ehr_ref,
                   w_q_ref, b_q_ref,
                   w_kv_ref, b_kv_ref,
                   s_mask_ref, den_mask_ref, p_mask_ref, c_mask_ref,
                   w1a_ref, w1b_ref, b1_ref, w2_ref, b2_ref,
                   out_ref):
    """One TB-row batch tile per grid step; batch on sublanes, (key, K|V, embed) on lanes."""
    f32 = jnp.float32
    text = text_ref[...]                                                # (TB, E)
    ehr = ehr_ref[...]                                                  # (TB, M*D)

    # Q replicated onto the K lanes of every key slot (1/sqrt(hd) already folded in);
    # K|V for all M keys from one block-diagonal matmul (ehr_proj already folded in).
    q = jnp.dot(text, w_q_ref[...], preferred_element_type=f32) + b_q_ref[...]   # (TB, M*2E)
    kv = jnp.dot(ehr, w_kv_ref[...], preferred_element_type=f32) + b_kv_ref[...] # (TB, M*2E)

    # Per-(key, head) scores via lane-mask matmul (V lanes of q are zero).
    s = jnp.dot(q * kv, s_mask_ref[...], preferred_element_type=f32)   # (TB, M*H)
    s = s - jnp.max(s, axis=-1, keepdims=True)    # per-row constant: softmax-invariant stabilizer
    p = jnp.exp(s)
    den = jnp.dot(p, den_mask_ref[...], preferred_element_type=f32)    # per-head sums, bcast (TB, M*H)
    r = pl.reciprocal(den, approx=True)
    r = r * (2.0 - den * r)                       # one Newton step keeps the 1e-4 tolerance
    p = p * r                                                           # softmax over keys

    # Broadcast the attention weights onto the V lanes, weight, and reduce over keys.
    p_full = jnp.dot(p, p_mask_ref[...], preferred_element_type=f32)   # (TB, M*2E), V lanes only
    ctx = jnp.dot(p_full * kv, c_mask_ref[...], preferred_element_type=f32)      # (TB, E)

    # Merge MLP; out_proj is folded into w1a, concat handled by column-split W1.
    h1 = (jnp.dot(ctx, w1a_ref[...], preferred_element_type=f32)
          + jnp.dot(text, w1b_ref[...], preferred_element_type=f32)
          + b1_ref[...])
    h1 = _gelu_exact(h1)
    h2 = jnp.dot(h1, w2_ref[...], preferred_element_type=f32) + b2_ref[...]
    out_ref[...] = _gelu_exact(h2).astype(out_ref.dtype)


def _batch_tile(batch):
    """Rows per grid step: multiple of 8, capped at 256, >=2 grid steps once there is enough work."""
    tb = min(256, pl.cdiv(batch, 2) if batch >= 16 else batch)
    return max(8, ((tb + 7) // 8) * 8)


@jax.jit
def attention_fusion_model(ehr_list, text, params):
    """Full AttentionFusionModel forward. ehr_list: (B, M, D); text: (B, E) -> (B, E)."""
    B, M, D = ehr_list.shape
    E = text.shape[-1]
    H = NUM_HEADS
    assert E % H == 0, "merge_embed_dim must be divisible by num_heads"
    hd = E // H
    L = M * 2 * E                 # lanes per sample: [k_0|v_0 | k_1|v_1 | ... ]
    MH = M * H                    # score columns per sample: (key m, head h) = m*H + h
    scale = 1.0 / math.sqrt(hd)
    f32 = jnp.float32
    hi = jax.lax.Precision.HIGHEST

    # ---- wrapper-side weight folding / layout plumbing (all free, outside the kernel) ----
    # ehr_proj folded into the fused K|V projection.
    w_kv_t = params["w_in"][E:].T.astype(f32)                                   # (E, 2E) = [Wk^T|Wv^T]
    w_ehrkv_t = jnp.dot(params["w_ehr"].T.astype(f32), w_kv_t, precision=hi)    # (D, 2E)
    b_ehrkv = (jnp.dot(params["b_ehr"].astype(f32), w_kv_t, precision=hi)
               + params["b_in"][E:].astype(f32))                                # (2E,)
    # Block-diagonal over the M key slots: one (M*D, M*2E) matmul makes KV for all keys at once.
    w_kv_bd = jnp.einsum("mn,de->mdne", jnp.eye(M, dtype=f32), w_ehrkv_t).reshape(M * D, L)
    b_kv_bd = jnp.tile(b_ehrkv, M).reshape(1, L)

    # Lane bookkeeping for the flat (key m, K|V, embed e) layout.
    lane = jnp.arange(L)
    seg = lane // (2 * E)                       # key slot m of this lane
    off = lane % (2 * E)
    is_k = off < E                              # K lanes vs V lanes
    emb = jnp.where(is_k, off, off - E)         # embedding index within K/V
    head = emb // hd
    col = jnp.arange(MH)
    col_m = col // H
    col_h = col % H

    # Q replicated onto the K lanes of every key slot; 1/sqrt(hd) folded into weights+bias.
    w_q_t = params["w_in"][:E].T.astype(f32) * scale                            # (E, E)
    b_q = params["b_in"][:E].astype(f32) * scale                                # (E,)
    w_q_rep = jnp.where(is_k[None, :], w_q_t[:, emb], 0.0)                      # (E, L)
    b_q_rep = jnp.where(is_k, b_q[emb], 0.0).reshape(1, L)

    # Exact 0/1 lane-selection masks so every attention reduction is an MXU matmul.
    s_mask = (is_k[:, None] & (seg[:, None] == col_m[None, :])
              & (head[:, None] == col_h[None, :])).astype(f32)                  # (L, M*H)
    den_mask = (col_h[:, None] == col_h[None, :]).astype(f32)                   # (M*H, M*H)
    p_mask = ((~is_k)[None, :] & (col_m[:, None] == seg[None, :])
              & (col_h[:, None] == head[None, :])).astype(f32)                  # (M*H, L)
    c_mask = ((~is_k)[:, None]
              & (emb[:, None] == jnp.arange(E)[None, :])).astype(f32)           # (L, E)

    # out_proj folded into the first merge linear; concat handled by column-splitting W1.
    w_o_t = params["w_o"].T.astype(f32)
    w1a_t = params["w1"][:, :E].T.astype(f32)
    w1b_t = params["w1"][:, E:].T.astype(f32)
    w1a_eff = jnp.dot(w_o_t, w1a_t, precision=hi)                               # (E, E)
    b1_eff = (jnp.dot(params["b_o"].astype(f32), w1a_t, precision=hi)
              + params["b1"].astype(f32)).reshape(1, E)
    w2_t = params["w2"].T.astype(f32)
    b2 = params["b2"].astype(f32).reshape(1, E)

    # Batched activations: batch on sublanes, padded to a multiple of the batch tile.
    TB = _batch_tile(B)
    B_pad = pl.cdiv(B, TB) * TB
    pad = B_pad - B
    text2 = jnp.pad(text.astype(f32), ((0, pad), (0, 0)))                       # (B_pad, E)
    ehr2 = jnp.pad(ehr_list.astype(f32).reshape(B, M * D), ((0, pad), (0, 0)))  # (B_pad, M*D)

    inv = lambda shape: pl.BlockSpec(shape, lambda i: (0, 0))   # grid-invariant, VMEM-resident
    in_specs = [
        pl.BlockSpec((TB, E), lambda i: (i, 0)),                # text tile
        pl.BlockSpec((TB, M * D), lambda i: (i, 0)),            # flattened EHR tile
        inv((E, L)), inv((1, L)),                               # replicated+scaled Q projection
        inv((M * D, L)), inv((1, L)),                           # fused ehr_proj+KV (block diagonal)
        inv((L, MH)), inv((MH, MH)), inv((MH, L)), inv((L, E)), # attention lane masks
        inv((E, E)), inv((E, E)), inv((1, E)),                  # merge linear 1 (out_proj folded)
        inv((E, E)), inv((1, E)),                               # merge linear 2
    ]
    out = pl.pallas_call(
        _fusion_kernel,
        grid=(pl.cdiv(B_pad, TB),),
        in_specs=in_specs,
        out_specs=pl.BlockSpec((TB, E), lambda i: (i, 0)),
        out_shape=jax.ShapeDtypeStruct((B_pad, E), f32),
        compiler_params=pltpu.CompilerParams(
            dimension_semantics=("parallel",)),                 # v7x: 2 TCs split the batch tiles
    )(text2, ehr2, w_q_rep, b_q_rep, w_kv_bd, b_kv_bd,
      s_mask, den_mask, p_mask, c_mask,
      w1a_eff, w1b_t, b1_eff, w2_t, b2)
    return out[:B]


def reference_model(ehr_list, text, params):
    """Pure-JAX reference matching the PyTorch AttentionFusionModel forward."""
    B, M, _ = ehr_list.shape
    E = text.shape[-1]
    H = NUM_HEADS
    hd = E // H
    ehr_e = ehr_list @ params["w_ehr"].T + params["b_ehr"]          # (B, M, E)
    wq, wk, wv = jnp.split(params["w_in"], 3, axis=0)
    bq, bk, bv = jnp.split(params["b_in"], 3, axis=0)
    q = text @ wq.T + bq                                            # (B, E)
    k = ehr_e @ wk.T + bk                                           # (B, M, E)
    v = ehr_e @ wv.T + bv
    qh = q.reshape(B, H, hd)
    kh = k.reshape(B, M, H, hd)
    vh = v.reshape(B, M, H, hd)
    s = jnp.einsum("bhd,bmhd->bhm", qh, kh) / math.sqrt(hd)
    a = jax.nn.softmax(s, axis=-1)
    ctx = jnp.einsum("bhm,bmhd->bhd", a, vh).reshape(B, E)
    fused = ctx @ params["w_o"].T + params["b_o"]
    x = jnp.concatenate([fused, text], axis=-1)
    h1 = jax.nn.gelu(x @ params["w1"].T + params["b1"], approximate=False)
    return jax.nn.gelu(h1 @ params["w2"].T + params["b2"], approximate=False)


def init_params(key, ehr_embed_dim, merge_embed_dim):
    """Deterministic synthetic parameters in PyTorch conventions (W: (out, in))."""
    E, D = merge_embed_dim, ehr_embed_dim
    ks = jax.random.split(key, 10)

    def lin(kw, kb, out_d, in_d):
        w = jax.random.normal(kw, (out_d, in_d), jnp.float32) * 0.08
        b = jax.random.normal(kb, (out_d,), jnp.float32) * 0.02
        return w, b

    w_ehr, b_ehr = lin(ks[0], ks[1], E, D)          # ehr_proj
    w_in, b_in = lin(ks[2], ks[3], 3 * E, E)        # nn.MultiheadAttention in_proj
    w_o, b_o = lin(ks[4], ks[5], E, E)              # out_proj
    w1, b1 = lin(ks[6], ks[7], E, 2 * E)            # merge_embed[0]
    w2, b2 = lin(ks[8], ks[9], E, E)                # merge_embed[2]
    return dict(w_ehr=w_ehr, b_ehr=b_ehr, w_in=w_in, b_in=b_in,
                w_o=w_o, b_o=b_o, w1=w1, b1=b1, w2=w2, b2=b2)


if __name__ == "__main__":
    batch = 2
    num_models = 3        # number of EHR models being fused (keys/values length)
    ehr_embed_dim = 64
    merge_embed_dim = 32  # == text_embed_dim (required by the torch forward); divisible by 4 heads

    key = jax.random.PRNGKey(0)
    k_ehr, k_text, k_params = jax.random.split(key, 3)
    ehr_list = jax.random.normal(k_ehr, (batch, num_models, ehr_embed_dim), jnp.float32)
    text = jax.random.normal(k_text, (batch, merge_embed_dim), jnp.float32)
    params = init_params(k_params, ehr_embed_dim, merge_embed_dim)

    out = attention_fusion_model(ehr_list, text, params)
    out = jax.block_until_ready(out)

    expected = reference_model(ehr_list, text, params)
    assert out.shape == (batch, merge_embed_dim)
    max_err = jnp.max(jnp.abs(out - expected))
    assert jnp.allclose(out, expected, atol=1e-4, rtol=1e-4), f"max abs err {max_err}"
    print("KERNEL_OK")
</pallas_src>

<mosaic_0001>
module attributes {stable_mosaic.version = 11 : i64} {
  func.func @_fusion_kernel(%arg0: i32, %arg1: memref<8x32xf32, #tpu.memory_space<vmem>>, %arg2: memref<8x192xf32, #tpu.memory_space<vmem>>, %arg3: memref<32x192xf32, #tpu.memory_space<vmem>>, %arg4: memref<1x192xf32, #tpu.memory_space<vmem>>, %arg5: memref<192x192xf32, #tpu.memory_space<vmem>>, %arg6: memref<1x192xf32, #tpu.memory_space<vmem>>, %arg7: memref<192x12xf32, #tpu.memory_space<vmem>>, %arg8: memref<12x12xf32, #tpu.memory_space<vmem>>, %arg9: memref<12x192xf32, #tpu.memory_space<vmem>>, %arg10: memref<192x32xf32, #tpu.memory_space<vmem>>, %arg11: memref<32x32xf32, #tpu.memory_space<vmem>>, %arg12: memref<32x32xf32, #tpu.memory_space<vmem>>, %arg13: memref<1x32xf32, #tpu.memory_space<vmem>>, %arg14: memref<32x32xf32, #tpu.memory_space<vmem>>, %arg15: memref<1x32xf32, #tpu.memory_space<vmem>>, %arg16: memref<8x32xf32, #tpu.memory_space<vmem>>) attributes {dimension_semantics = [#tpu.dimension_semantics<parallel>], iteration_bounds = array<i64: 1>, scalar_prefetch = 0 : i64, scratch_operands = 0 : i64, tpu.core_type = #tpu.core_type<tc>, window_params = [{transform_indices = @transform_0, window_bounds = array<i64: 8, 32>}, {transform_indices = @transform_1, window_bounds = array<i64: 8, 192>}, {pipeline_mode = #tpu.pipeline_mode<synchronous>, transform_indices = @transform_2, window_bounds = array<i64: 32, 192>}, {pipeline_mode = #tpu.pipeline_mode<synchronous>, transform_indices = @transform_3, window_bounds = array<i64: 1, 192>}, {pipeline_mode = #tpu.pipeline_mode<synchronous>, transform_indices = @transform_4, window_bounds = array<i64: 192, 192>}, {pipeline_mode = #tpu.pipeline_mode<synchronous>, transform_indices = @transform_5, window_bounds = array<i64: 1, 192>}, {pipeline_mode = #tpu.pipeline_mode<synchronous>, transform_indices = @transform_6, window_bounds = array<i64: 192, 12>}, {pipeline_mode = #tpu.pipeline_mode<synchronous>, transform_indices = @transform_7, window_bounds = array<i64: 12, 12>}, {pipeline_mode = #tpu.pipeline_mode<synchronous>, transform_indices = @transform_8, window_bounds = array<i64: 12, 192>}, {pipeline_mode = #tpu.pipeline_mode<synchronous>, transform_indices = @transform_9, window_bounds = array<i64: 192, 32>}, {pipeline_mode = #tpu.pipeline_mode<synchronous>, transform_indices = @transform_10, window_bounds = array<i64: 32, 32>}, {pipeline_mode = #tpu.pipeline_mode<synchronous>, transform_indices = @transform_11, window_bounds = array<i64: 32, 32>}, {pipeline_mode = #tpu.pipeline_mode<synchronous>, transform_indices = @transform_12, window_bounds = array<i64: 1, 32>}, {pipeline_mode = #tpu.pipeline_mode<synchronous>, transform_indices = @transform_13, window_bounds = array<i64: 32, 32>}, {pipeline_mode = #tpu.pipeline_mode<synchronous>, transform_indices = @transform_14, window_bounds = array<i64: 1, 32>}, {transform_indices = @transform_15, window_bounds = array<i64: 8, 32>}]} {
    %c0 = arith.constant 0 : index
    %c0_0 = arith.constant 0 : index
    %0 = vector.load %arg1[%c0, %c0_0] : memref<8x32xf32, #tpu.memory_space<vmem>>, vector<8x32xf32>
    %c0_1 = arith.constant 0 : index
    %c0_2 = arith.constant 0 : index
    %1 = vector.load %arg2[%c0_1, %c0_2] : memref<8x192xf32, #tpu.memory_space<vmem>>, vector<8x192xf32>
    %c0_3 = arith.constant 0 : index
    %c0_4 = arith.constant 0 : index
    %2 = vector.load %arg3[%c0_3, %c0_4] : memref<32x192xf32, #tpu.memory_space<vmem>>, vector<32x192xf32>
    %cst = arith.constant dense<0.000000e+00> : vector<8x192xf32>
    %3 = tpu.matmul %0, %2, %cst {dimension_numbers = #tpu.dot_dimension_numbers<[1], [0], [0], [1], [0, 0, 1, 1], [], []>} : vector<8x32xf32>, vector<32x192xf32>, vector<8x192xf32> -> vector<8x192xf32>
    %c0_5 = arith.constant 0 : index
    %c0_6 = arith.constant 0 : index
    %4 = vector.load %arg4[%c0_5, %c0_6] : memref<1x192xf32, #tpu.memory_space<vmem>>, vector<1x192xf32>
    %5 = vector.broadcast %4 : vector<1x192xf32> to vector<8x192xf32>
    %6 = arith.addf %3, %5 : vector<8x192xf32>
    %c0_7 = arith.constant 0 : index
    %c0_8 = arith.constant 0 : index
    %7 = vector.load %arg5[%c0_7, %c0_8] : memref<192x192xf32, #tpu.memory_space<vmem>>, vector<192x192xf32>
    %cst_9 = arith.constant dense<0.000000e+00> : vector<8x192xf32>
    %8 = tpu.matmul %1, %7, %cst_9 {dimension_numbers = #tpu.dot_dimension_numbers<[1], [0], [0], [1], [0, 0, 1, 1], [], []>} : vector<8x192xf32>, vector<192x192xf32>, vector<8x192xf32> -> vector<8x192xf32>
    %c0_10 = arith.constant 0 : index
    %c0_11 = arith.constant 0 : index
    %9 = vector.load %arg6[%c0_10, %c0_11] : memref<1x192xf32, #tpu.memory_space<vmem>>, vector<1x192xf32>
    %10 = vector.broadcast %9 : vector<1x192xf32> to vector<8x192xf32>
    %11 = arith.addf %8, %10 : vector<8x192xf32>
    %12 = arith.mulf %6, %11 : vector<8x192xf32>
    %c0_12 = arith.constant 0 : index
    %c0_13 = arith.constant 0 : index
    %13 = vector.load %arg7[%c0_12, %c0_13] : memref<192x12xf32, #tpu.memory_space<vmem>>, vector<192x12xf32>
    %cst_14 = arith.constant dense<0.000000e+00> : vector<8x12xf32>
    %14 = tpu.matmul %12, %13, %cst_14 {dimension_numbers = #tpu.dot_dimension_numbers<[1], [0], [0], [1], [0, 0, 1, 1], [], []>} : vector<8x192xf32>, vector<192x12xf32>, vector<8x12xf32> -> vector<8x12xf32>
    %cst_15 = arith.constant dense<0xFF800000> : vector<8xf32>
    %15 = vector.multi_reduction <maximumf>, %14, %cst_15 [1] : vector<8x12xf32> to vector<8xf32>
    %16 = vector.shape_cast %15 : vector<8xf32> to vector<8x1xf32>
    %17 = vector.broadcast %16 : vector<8x1xf32> to vector<8x12xf32>
    %18 = arith.subf %14, %17 : vector<8x12xf32>
    %19 = math.exp %18 : vector<8x12xf32>
    %c0_16 = arith.constant 0 : index
    %c0_17 = arith.constant 0 : index
    %20 = vector.load %arg8[%c0_16, %c0_17] : memref<12x12xf32, #tpu.memory_space<vmem>>, vector<12x12xf32>
    %cst_18 = arith.constant dense<0.000000e+00> : vector<8x12xf32>
    %21 = tpu.matmul %19, %20, %cst_18 {dimension_numbers = #tpu.dot_dimension_numbers<[1], [0], [0], [1], [0, 0, 1, 1], [], []>} : vector<8x12xf32>, vector<12x12xf32>, vector<8x12xf32> -> vector<8x12xf32>
    %22 = tpu.reciprocal %21 {approx = true} : vector<8x12xf32> -> vector<8x12xf32>
    %23 = arith.mulf %21, %22 : vector<8x12xf32>
    %cst_19 = arith.constant 2.000000e+00 : f32
    %24 = vector.broadcast %cst_19 : f32 to vector<8x12xf32>
    %25 = arith.subf %24, %23 : vector<8x12xf32>
    %26 = arith.mulf %22, %25 : vector<8x12xf32>
    %27 = arith.mulf %19, %26 : vector<8x12xf32>
    %c0_20 = arith.constant 0 : index
    %c0_21 = arith.constant 0 : index
    %28 = vector.load %arg9[%c0_20, %c0_21] : memref<12x192xf32, #tpu.memory_space<vmem>>, vector<12x192xf32>
    %cst_22 = arith.constant dense<0.000000e+00> : vector<8x192xf32>
    %29 = tpu.matmul %27, %28, %cst_22 {dimension_numbers = #tpu.dot_dimension_numbers<[1], [0], [0], [1], [0, 0, 1, 1], [], []>} : vector<8x12xf32>, vector<12x192xf32>, vector<8x192xf32> -> vector<8x192xf32>
    %30 = arith.mulf %29, %11 : vector<8x192xf32>
    %c0_23 = arith.constant 0 : index
    %c0_24 = arith.constant 0 : index
    %31 = vector.load %arg10[%c0_23, %c0_24] : memref<192x32xf32, #tpu.memory_space<vmem>>, vector<192x32xf32>
    %cst_25 = arith.constant dense<0.000000e+00> : vector<8x32xf32>
    %32 = tpu.matmul %30, %31, %cst_25 {dimension_numbers = #tpu.dot_dimension_numbers<[1], [0], [0], [1], [0, 0, 1, 1], [], []>} : vector<8x192xf32>, vector<192x32xf32>, vector<8x32xf32> -> vector<8x32xf32>
    %c0_26 = arith.constant 0 : index
    %c0_27 = arith.constant 0 : index
    %33 = vector.load %arg11[%c0_26, %c0_27] : memref<32x32xf32, #tpu.memory_space<vmem>>, vector<32x32xf32>
    %cst_28 = arith.constant dense<0.000000e+00> : vector<8x32xf32>
    %34 = tpu.matmul %32, %33, %cst_28 {dimension_numbers = #tpu.dot_dimension_numbers<[1], [0], [0], [1], [0, 0, 1, 1], [], []>} : vector<8x32xf32>, vector<32x32xf32>, vector<8x32xf32> -> vector<8x32xf32>
    %c0_29 = arith.constant 0 : index
    %c0_30 = arith.constant 0 : index
    %35 = vector.load %arg12[%c0_29, %c0_30] : memref<32x32xf32, #tpu.memory_space<vmem>>, vector<32x32xf32>
    %cst_31 = arith.constant dense<0.000000e+00> : vector<8x32xf32>
    %36 = tpu.matmul %0, %35, %cst_31 {dimension_numbers = #tpu.dot_dimension_numbers<[1], [0], [0], [1], [0, 0, 1, 1], [], []>} : vector<8x32xf32>, vector<32x32xf32>, vector<8x32xf32> -> vector<8x32xf32>
    %37 = arith.addf %34, %36 : vector<8x32xf32>
    %c0_32 = arith.constant 0 : index
    %c0_33 = arith.constant 0 : index
    %38 = vector.load %arg13[%c0_32, %c0_33] : memref<1x32xf32, #tpu.memory_space<vmem>>, vector<1x32xf32>
    %39 = vector.broadcast %38 : vector<1x32xf32> to vector<8x32xf32>
    %40 = arith.addf %37, %39 : vector<8x32xf32>
    %cst_34 = arith.constant 0.707106769 : f32
    %41 = vector.broadcast %cst_34 : f32 to vector<8x32xf32>
    %42 = arith.mulf %40, %41 : vector<8x32xf32>
    %43 = math.absf %42 : vector<8x32xf32>
    %cst_35 = arith.constant 0.327591091 : f32
    %44 = vector.broadcast %cst_35 : f32 to vector<8x32xf32>
    %45 = arith.mulf %44, %43 : vector<8x32xf32>
    %cst_36 = arith.constant 1.000000e+00 : f32
    %46 = vector.broadcast %cst_36 : f32 to vector<8x32xf32>
    %47 = arith.addf %46, %45 : vector<8x32xf32>
    %cst_37 = arith.constant 1.000000e+00 : f32
    %48 = vector.broadcast %cst_37 : f32 to vector<8x32xf32>
    %49 = arith.divf %48, %47 : vector<8x32xf32>
    %cst_38 = arith.constant 1.06140542 : f32
    %50 = vector.broadcast %cst_38 : f32 to vector<8x32xf32>
    %51 = arith.mulf %49, %50 : vector<8x32xf32>
    %cst_39 = arith.constant -1.45315206 : f32
    %52 = vector.broadcast %cst_39 : f32 to vector<8x32xf32>
    %53 = arith.addf %52, %51 : vector<8x32xf32>
    %54 = arith.mulf %49, %53 : vector<8x32xf32>
    %cst_40 = arith.constant 1.42141378 : f32
    %55 = vector.broadcast %cst_40 : f32 to vector<8x32xf32>
    %56 = arith.addf %55, %54 : vector<8x32xf32>
    %57 = arith.mulf %49, %56 : vector<8x32xf32>
    %cst_41 = arith.constant -0.284496725 : f32
    %58 = vector.broadcast %cst_41 : f32 to vector<8x32xf32>
    %59 = arith.addf %58, %57 : vector<8x32xf32>
    %60 = arith.mulf %49, %59 : vector<8x32xf32>
    %cst_42 = arith.constant 0.254829586 : f32
    %61 = vector.broadcast %cst_42 : f32 to vector<8x32xf32>
    %62 = arith.addf %61, %60 : vector<8x32xf32>
    %63 = arith.mulf %49, %62 : vector<8x32xf32>
    %cst_43 = arith.constant 0.000000e+00 : f32
    %64 = vector.broadcast %cst_43 : f32 to vector<8x32xf32>
    %65 = arith.subf %64, %43 : vector<8x32xf32>
    %66 = arith.mulf %65, %43 : vector<8x32xf32>
    %67 = math.exp %66 : vector<8x32xf32>
    %68 = arith.mulf %63, %67 : vector<8x32xf32>
    %cst_44 = arith.constant 1.000000e+00 : f32
    %69 = vector.broadcast %cst_44 : f32 to vector<8x32xf32>
    %70 = arith.subf %69, %68 : vector<8x32xf32>
    %cst_45 = arith.constant 0.000000e+00 : f32
    %71 = vector.broadcast %cst_45 : f32 to vector<8x32xf32>
    %72 = arith.cmpf oge, %42, %71 : vector<8x32xf32>
    %cst_46 = arith.constant 0.000000e+00 : f32
    %73 = vector.broadcast %cst_46 : f32 to vector<8x32xf32>
    %74 = arith.subf %73, %70 : vector<8x32xf32>
    %75 = arith.select %72, %70, %74 : vector<8x32xi1>, vector<8x32xf32>
    %cst_47 = arith.constant 5.000000e-01 : f32
    %76 = vector.broadcast %cst_47 : f32 to vector<8x32xf32>
    %77 = arith.mulf %40, %76 : vector<8x32xf32>
    %cst_48 = arith.constant 1.000000e+00 : f32
    %78 = vector.broadcast %cst_48 : f32 to vector<8x32xf32>
    %79 = arith.addf %78, %75 : vector<8x32xf32>
    %80 = arith.mulf %77, %79 : vector<8x32xf32>
    %c0_49 = arith.constant 0 : index
    %c0_50 = arith.constant 0 : index
    %81 = vector.load %arg14[%c0_49, %c0_50] : memref<32x32xf32, #tpu.memory_space<vmem>>, vector<32x32xf32>
    %cst_51 = arith.constant dense<0.000000e+00> : vector<8x32xf32>
    %82 = tpu.matmul %80, %81, %cst_51 {dimension_numbers = #tpu.dot_dimension_numbers<[1], [0], [0], [1], [0, 0, 1, 1], [], []>} : vector<8x32xf32>, vector<32x32xf32>, vector<8x32xf32> -> vector<8x32xf32>
    %c0_52 = arith.constant 0 : index
    %c0_53 = arith.constant 0 : index
    %83 = vector.load %arg15[%c0_52, %c0_53] : memref<1x32xf32, #tpu.memory_space<vmem>>, vector<1x32xf32>
    %84 = vector.broadcast %83 : vector<1x32xf32> to vector<8x32xf32>
    %85 = arith.addf %82, %84 : vector<8x32xf32>
    %cst_54 = arith.constant 0.707106769 : f32
    %86 = vector.broadcast %cst_54 : f32 to vector<8x32xf32>
    %87 = arith.mulf %85, %86 : vector<8x32xf32>
    %88 = math.absf %87 : vector<8x32xf32>
    %cst_55 = arith.constant 0.327591091 : f32
    %89 = vector.broadcast %cst_55 : f32 to vector<8x32xf32>
    %90 = arith.mulf %89, %88 : vector<8x32xf32>
    %cst_56 = arith.constant 1.000000e+00 : f32
    %91 = vector.broadcast %cst_56 : f32 to vector<8x32xf32>
    %92 = arith.addf %91, %90 : vector<8x32xf32>
    %cst_57 = arith.constant 1.000000e+00 : f32
    %93 = vector.broadcast %cst_57 : f32 to vector<8x32xf32>
    %94 = arith.divf %93, %92 : vector<8x32xf32>
    %cst_58 = arith.constant 1.06140542 : f32
    %95 = vector.broadcast %cst_58 : f32 to vector<8x32xf32>
    %96 = arith.mulf %94, %95 : vector<8x32xf32>
    %cst_59 = arith.constant -1.45315206 : f32
    %97 = vector.broadcast %cst_59 : f32 to vector<8x32xf32>
    %98 = arith.addf %97, %96 : vector<8x32xf32>
    %99 = arith.mulf %94, %98 : vector<8x32xf32>
    %cst_60 = arith.constant 1.42141378 : f32
    %100 = vector.broadcast %cst_60 : f32 to vector<8x32xf32>
    %101 = arith.addf %100, %99 : vector<8x32xf32>
    %102 = arith.mulf %94, %101 : vector<8x32xf32>
    %cst_61 = arith.constant -0.284496725 : f32
    %103 = vector.broadcast %cst_61 : f32 to vector<8x32xf32>
    %104 = arith.addf %103, %102 : vector<8x32xf32>
    %105 = arith.mulf %94, %104 : vector<8x32xf32>
    %cst_62 = arith.constant 0.254829586 : f32
    %106 = vector.broadcast %cst_62 : f32 to vector<8x32xf32>
    %107 = arith.addf %106, %105 : vector<8x32xf32>
    %108 = arith.mulf %94, %107 : vector<8x32xf32>
    %cst_63 = arith.constant 0.000000e+00 : f32
    %109 = vector.broadcast %cst_63 : f32 to vector<8x32xf32>
    %110 = arith.subf %109, %88 : vector<8x32xf32>
    %111 = arith.mulf %110, %88 : vector<8x32xf32>
    %112 = math.exp %111 : vector<8x32xf32>
    %113 = arith.mulf %108, %112 : vector<8x32xf32>
    %cst_64 = arith.constant 1.000000e+00 : f32
    %114 = vector.broadcast %cst_64 : f32 to vector<8x32xf32>
    %115 = arith.subf %114, %113 : vector<8x32xf32>
    %cst_65 = arith.constant 0.000000e+00 : f32
    %116 = vector.broadcast %cst_65 : f32 to vector<8x32xf32>
    %117 = arith.cmpf oge, %87, %116 : vector<8x32xf32>
    %cst_66 = arith.constant 0.000000e+00 : f32
    %118 = vector.broadcast %cst_66 : f32 to vector<8x32xf32>
    %119 = arith.subf %118, %115 : vector<8x32xf32>
    %120 = arith.select %117, %115, %119 : vector<8x32xi1>, vector<8x32xf32>
    %cst_67 = arith.constant 5.000000e-01 : f32
    %121 = vector.broadcast %cst_67 : f32 to vector<8x32xf32>
    %122 = arith.mulf %85, %121 : vector<8x32xf32>
    %cst_68 = arith.constant 1.000000e+00 : f32
    %123 = vector.broadcast %cst_68 : f32 to vector<8x32xf32>
    %124 = arith.addf %123, %120 : vector<8x32xf32>
    %125 = arith.mulf %122, %124 : vector<8x32xf32>
    %c0_69 = arith.constant 0 : index
    %c0_70 = arith.constant 0 : index
    %126 = vector.load %arg16[%c0_69, %c0_70] : memref<8x32xf32, #tpu.memory_space<vmem>>, vector<8x32xf32>
    tpu.vector_store %arg16[%c0_69, %c0_70], %125 {strides = array<i32>} : memref<8x32xf32, #tpu.memory_space<vmem>>, vector<8x32xf32>,
    return
  }
  func.func @transform_0(%arg0: i32) -> (i32, i32) {
    %c0_i32 = arith.constant 0 : i32
    %c0_i32_0 = arith.constant 0 : i32
    return %arg0, %c0_i32 : i32, i32
  }
  func.func @transform_1(%arg0: i32) -> (i32, i32) {
    %c0_i32 = arith.constant 0 : i32
    %c0_i32_0 = arith.constant 0 : i32
    return %arg0, %c0_i32 : i32, i32
  }
  func.func @transform_2(%arg0: i32) -> (i32, i32) {
    %c0_i32 = arith.constant 0 : i32
    %c0_i32_0 = arith.constant 0 : i32
    %c0_i32_1 = arith.constant 0 : i32
    return %c0_i32, %c0_i32_0 : i32, i32
  }
  func.func @transform_3(%arg0: i32) -> (i32, i32) {
    %c0_i32 = arith.constant 0 : i32
    %c0_i32_0 = arith.constant 0 : i32
    %c0_i32_1 = arith.constant 0 : i32
    return %c0_i32, %c0_i32_0 : i32, i32
  }
  func.func @transform_4(%arg0: i32) -> (i32, i32) {
    %c0_i32 = arith.constant 0 : i32
    %c0_i32_0 = arith.constant 0 : i32
    %c0_i32_1 = arith.constant 0 : i32
    return %c0_i32, %c0_i32_0 : i32, i32
  }
  func.func @transform_5(%arg0: i32) -> (i32, i32) {
    %c0_i32 = arith.constant 0 : i32
    %c0_i32_0 = arith.constant 0 : i32
    %c0_i32_1 = arith.constant 0 : i32
    return %c0_i32, %c0_i32_0 : i32, i32
  }
  func.func @transform_6(%arg0: i32) -> (i32, i32) {
    %c0_i32 = arith.constant 0 : i32
    %c0_i32_0 = arith.constant 0 : i32
    %c0_i32_1 = arith.constant 0 : i32
    return %c0_i32, %c0_i32_0 : i32, i32
  }
  func.func @transform_7(%arg0: i32) -> (i32, i32) {
    %c0_i32 = arith.constant 0 : i32
    %c0_i32_0 = arith.constant 0 : i32
    %c0_i32_1 = arith.constant 0 : i32
    return %c0_i32, %c0_i32_0 : i32, i32
  }
  func.func @transform_8(%arg0: i32) -> (i32, i32) {
    %c0_i32 = arith.constant 0 : i32
    %c0_i32_0 = arith.constant 0 : i32
    %c0_i32_1 = arith.constant 0 : i32
    return %c0_i32, %c0_i32_0 : i32, i32
  }
  func.func @transform_9(%arg0: i32) -> (i32, i32) {
    %c0_i32 = arith.constant 0 : i32
    %c0_i32_0 = arith.constant 0 : i32
    %c0_i32_1 = arith.constant 0 : i32
    return %c0_i32, %c0_i32_0 : i32, i32
  }
  func.func @transform_10(%arg0: i32) -> (i32, i32) {
    %c0_i32 = arith.constant 0 : i32
    %c0_i32_0 = arith.constant 0 : i32
    %c0_i32_1 = arith.constant 0 : i32
    return %c0_i32, %c0_i32_0 : i32, i32
  }
  func.func @transform_11(%arg0: i32) -> (i32, i32) {
    %c0_i32 = arith.constant 0 : i32
    %c0_i32_0 = arith.constant 0 : i32
    %c0_i32_1 = arith.constant 0 : i32
    return %c0_i32, %c0_i32_0 : i32, i32
  }
  func.func @transform_12(%arg0: i32) -> (i32, i32) {
    %c0_i32 = arith.constant 0 : i32
    %c0_i32_0 = arith.constant 0 : i32
    %c0_i32_1 = arith.constant 0 : i32
    return %c0_i32, %c0_i32_0 : i32, i32
  }
  func.func @transform_13(%arg0: i32) -> (i32, i32) {
    %c0_i32 = arith.constant 0 : i32
    %c0_i32_0 = arith.constant 0 : i32
    %c0_i32_1 = arith.constant 0 : i32
    return %c0_i32, %c0_i32_0 : i32, i32
  }
  func.func @transform_14(%arg0: i32) -> (i32, i32) {
    %c0_i32 = arith.constant 0 : i32
    %c0_i32_0 = arith.constant 0 : i32
    %c0_i32_1 = arith.constant 0 : i32
    return %c0_i32, %c0_i32_0 : i32, i32
  }
  func.func @transform_15(%arg0: i32) -> (i32, i32) {
    %c0_i32 = arith.constant 0 : i32
    %c0_i32_0 = arith.constant 0 : i32
    return %arg0, %c0_i32 : i32, i32
  }
}

</mosaic_0001>

<llo_original>
// kernel: tile.8
$region0: #{tile.8}
  #allocation0 [shape = 's32[1]{0}', space=sflag, size = 0x4, scoped, tag = 'scoped memory for tile.8']
  %s0 = inlined_call_operand.vmem [shape: f32[64], index: 0, kind: input, shape index: {}]
  %s1 = inlined_call_operand.vmem [shape: f32[3,64], index: 1, kind: output, shape index: {}]
  // Predicated region
  $region2: #{tile.8} parent=0 // pred_check
    _
  $region3: #{tile.8} parent=0 // pred_check_branch
    %3 = sbr.rel (0) target = $region5
  $region4: #{tile.8} parent=0 // pred_region
    _
  $region5: #{tile.8} parent=0 // pred_fallthru
    _
  %v4 = vld [vmem:[%s0] ss:$0 sm:$0xff]
  %5 = vst [vmem:[%s1] sm:$0xf] %v4

// kernel: tile.9
$region0: #{tile.9}
  %s0 = inlined_call_operand.vmem [shape: f32[3,64], index: 0, kind: input, shape index: {}]
  %s1 = inlined_call_operand.vmem [shape: f32[1,192], index: 1, kind: output, shape index: {}]
  $region1: #{tile.9} parent=0
    #allocation0 [shape = 'u8[8192]{0}', space=vmem, size = 0x2000, scoped, tag = 'scoped mem for output reshape']
    #allocation1 [shape = 'u8[4096]{0}', space=vmem, size = 0x1000, scoped, tag = 'scoped mem for input reshape']
    %s3 = sshllo.u32 0, 4
    %v4 = vld [vmem:[%s0] sm:%s3]
    %5 = vst [vmem:[#allocation1] sm:%s3] %v4
    %s6 = smov 3
    %v7 = vld [vmem:[#allocation1] ss:$2 sm:%s6]
    %vm8 = vcmask 523264
    %9 = vst.msk [vmem:[#allocation0] ss:$8 sm:$0x3] %vm8, %v7
    %s10 = scalar_lea.vmem [#allocation1], 1
    %v11 = vld [vmem:[%s10] sm:$0x1]
    %12 = vrot.lane.b32.xlu0 %v11, 64
    %v13 = vpop.permute.xlu0 %12
    %vm14 = vcmask 1048064
    %15 = vst.msk [vmem:[#allocation0] sm:$0x1] %vm14, %v13
    %s17 = sshllo.u32 0, 1
    %v19 = vld [vmem:[#allocation0] sm:%s17]
    %s20 = sshllo.u32 0, 1
    %21 = vst [vmem:[%s1] sm:%s20] %v19
    %s22 = scalar_lea.vmem [#allocation0], 8
    %v23 = vld [vmem:[%s22] sm:%s17]
    %s24 = sshllo.u32 0, 1
    %s25 = scalar_lea.vmem %s1, 1
    %26 = vst [vmem:[%s25] sm:%s24] %v23

</llo_original>
